<compile_context>
chip_gen: v6e
topology: v6e:2x2x1
jax: 0.10.0
libtpu: 0.0.40
codegen_flags: <defaults>
</compile_context>

<pallas_src>
import functools
import math

import numpy as np
import jax
import jax.numpy as jnp
from jax.experimental import pallas as pl
from jax.experimental.pallas import tpu as pltpu


# ----------------------------------------------------------------------------
# Exact (erf-based) GELU matching torch.nn.functional.gelu default.
# Polynomial erf (Abramowitz-Stegun 7.1.26, |err| ~ 1.5e-7): exp/mul/add/where
# only, guaranteed to lower in Mosaic.  On the bf16 path the 1/(1+p|x|) term
# uses the EUP approximate reciprocal (frees VALU issue slots).
# ----------------------------------------------------------------------------
def _erf_poly(x, approx_recip=False):
    a1, a2, a3, a4, a5 = 0.254829592, -0.284496736, 1.421413741, -1.453152027, 1.061405429
    p = 0.3275911
    sgn = jnp.where(x >= 0.0, 1.0, -1.0)
    ax = jnp.abs(x)
    denom = 1.0 + p * ax
    t = pl.reciprocal(denom, approx=True) if approx_recip else 1.0 / denom
    poly = ((((a5 * t + a4) * t + a3) * t + a2) * t + a1) * t
    return sgn * (1.0 - poly * jnp.exp(-ax * ax))


def _gelu(x, approx_recip=False):
    return 0.5 * x * (1.0 + _erf_poly(x * (1.0 / math.sqrt(2.0)), approx_recip))


# ----------------------------------------------------------------------------
# Pallas kernel: ExpertGraphConv forward for one tile of tokens.
# All heavy math is MXU matmuls; all VPU/EUP work is full 128-lane width.
# ----------------------------------------------------------------------------
def expert_graph_conv_kernel(bm_ref,     # SMEM (1,)            message bias
                             x_ref,      # (TN, E*D)            lane-packed features
                             wsc_ref,    # (E*D, E*E*D)         wide gate weight
                             adj_ref,    # (1, E*E*D)           sigmoid(adj), D-lane bcast, diag 0
                             wn_ref,     # (E*E*D, E*D)         stacked neighbor weight
                             ws_ref,     # (E*D, E*D)           block-diag self weight
                             bbig_ref,   # (1, E*D)             neighbor_b + self_b, tiled
                             out_ref,    # (TN, E*D)
                             *, num_experts, use_bf16):
    E = num_experts
    x = x_ref[...]                                              # (TN, E*D)  f32 or bf16
    bm = bm_ref[0]

    # 1. All E*E pair-gate scores, pre-broadcast over the D lanes, via ONE MXU
    #    matmul.  Column block (i*E+j): <x_i, wm_cur> + <x_j, wm_oth>.
    scores = jnp.dot(x, wsc_ref[...], preferred_element_type=jnp.float32) + bm
    strength = jax.nn.sigmoid(scores) * adj_ref[...]            # (TN, E*E*D), diag blocks == 0

    # 2. Gated messages: full-lane VPU multiply against x tiled along experts.
    #    Block (i*E+j) of x_tiled is x_j, so gated block (i,j) = x_j * s_ij.
    x_tiled = jnp.concatenate([x] * E, axis=1)                  # (TN, E*E*D)
    if use_bf16:
        gated = strength.astype(jnp.bfloat16) * x_tiled         # x already bf16
    else:
        gated = strength * x_tiled

    # 3. Neighbor + self transforms: two MXU matmuls, no concat; adds fold
    #    into f32 accumulation.
    h = jnp.dot(gated, wn_ref[...], preferred_element_type=jnp.float32)
    h = h + jnp.dot(x, ws_ref[...], preferred_element_type=jnp.float32)
    h = h + bbig_ref[...]

    out_ref[...] = _gelu(h, approx_recip=use_bf16).astype(out_ref.dtype)  # lane-dense store


# ----------------------------------------------------------------------------
# Wrapper: tiny one-time parameter preprocessing (plain JAX) + pallas_call.
# ----------------------------------------------------------------------------
def _round_up(x, m):
    return (x + m - 1) // m * m


def _pick_token_tile(n_tokens, cap=2048):
    # Multiple of 8, capped for VMEM (tile is only TN*512 B in f32); prefer a
    # grid of >= 2 steps so DMA pipelines and both v7x TensorCores get work.
    n8 = max(8, _round_up(n_tokens, 8))
    tile = min(cap, n8)
    if tile == n8 and n8 >= 16:
        tile = max(8, _round_up(n8 // 2, 8))
    return tile


def expert_graph_conv(expert_features, params, *, token_tile=None, use_bf16=False):
    x4 = expert_features.astype(jnp.float32)                    # (B, L, E, D)
    B, L, E, D = x4.shape
    # TODO(synk): the PyTorch E==1 branch (zero neighbor output, no neighbor
    # bias) is not reproduced by the fused matmuls; this kernel assumes E >= 2.
    assert E >= 2
    N = B * L
    x = x4.reshape(N, E * D)                                     # contiguous token-major slab

    TN = _pick_token_tile(N) if token_tile is None else token_tile
    assert TN % 8 == 0
    N_pad = pl.cdiv(N, TN) * TN
    if N_pad != N:
        x = jnp.pad(x, ((0, N_pad - N), (0, 0)))

    f32 = jnp.float32

    # --- wide gate weight (E*D, E*E*D): column block (i*E+j) carries wm_cur in
    #     row-block i and wm_oth in row-block j, replicated across its D lanes.
    wm = params["message_w"].reshape(2 * D).astype(f32)          # Linear(2D, 1) weight
    wm_cur, wm_oth = wm[:D], wm[D:]
    w_sc = jnp.zeros((E * D, E * E * D), f32)
    for i in range(E):
        for j in range(E):
            c0 = (i * E + j) * D
            blk = jnp.zeros((E * D, D), f32)
            blk = blk.at[i * D:(i + 1) * D, :].add(jnp.broadcast_to(wm_cur[:, None], (D, D)))
            blk = blk.at[j * D:(j + 1) * D, :].add(jnp.broadcast_to(wm_oth[:, None], (D, D)))
            w_sc = w_sc.at[:, c0:c0 + D].set(blk)
    bm = params["message_b"].reshape(1).astype(f32)

    # --- adjacency: sigmoid, diagonal masked to zero, each entry broadcast
    #     across its D-lane block -> (1, E*E*D)
    adj = jax.nn.sigmoid(params["adjacency_logits"]).astype(f32)
    adj = adj * (1.0 - jnp.eye(E, dtype=f32))
    adj_wide = jnp.repeat(adj.reshape(E * E), D).reshape(1, E * E * D)

    # --- stacked neighbor weight (E*E*D, E*D): block (i*E+j) -> column block i
    wn_t = params["neighbor_w"].T.astype(f32)                    # y = msg @ Wn.T
    w_n = jnp.zeros((E * E * D, E * D), f32)
    for i in range(E):
        for j in range(E):
            r0 = (i * E + j) * D
            w_n = w_n.at[r0:r0 + D, i * D:(i + 1) * D].set(wn_t)

    # --- block-diagonal self weight (E*D, E*D)
    ws_t = params["self_w"].T.astype(f32)
    w_s = jnp.zeros((E * D, E * D), f32)
    for e in range(E):
        w_s = w_s.at[e * D:(e + 1) * D, e * D:(e + 1) * D].set(ws_t)

    # --- fused bias (1, E*D)
    b_big = jnp.tile((params["neighbor_b"] + params["self_b"]).astype(f32)[None, :], (1, E))

    if use_bf16:
        x = x.astype(jnp.bfloat16)
        w_sc = w_sc.astype(jnp.bfloat16)
        w_n = w_n.astype(jnp.bfloat16)
        w_s = w_s.astype(jnp.bfloat16)

    kernel = functools.partial(expert_graph_conv_kernel, num_experts=E, use_bf16=use_bf16)

    out = pl.pallas_call(
        kernel,
        out_shape=jax.ShapeDtypeStruct((N_pad, E * D), jnp.float32),
        grid=(N_pad // TN,),
        in_specs=[
            pl.BlockSpec(memory_space=pltpu.MemorySpace.SMEM),          # bm
            pl.BlockSpec((TN, E * D), lambda t: (t, 0)),                # x (lane-packed tokens)
            pl.BlockSpec((E * D, E * E * D), lambda t: (0, 0)),         # wide gate weight
            pl.BlockSpec((1, E * E * D), lambda t: (0, 0)),             # masked sigmoid(adj), wide
            pl.BlockSpec((E * E * D, E * D), lambda t: (0, 0)),         # stacked neighbor weight
            pl.BlockSpec((E * D, E * D), lambda t: (0, 0)),             # block-diag self weight
            pl.BlockSpec((1, E * D), lambda t: (0, 0)),                 # fused bias
        ],
        out_specs=pl.BlockSpec((TN, E * D), lambda t: (t, 0)),
        compiler_params=pltpu.CompilerParams(dimension_semantics=("parallel",)),
    )(bm, x, w_sc, adj_wide, w_n, w_s, b_big)

    return out[:N].reshape(B, L, E, D)


# ----------------------------------------------------------------------------
# Pure-JAX reference (direct transcription of the PyTorch ExpertGraphConv).
# ----------------------------------------------------------------------------
def _ref_gelu(x):
    return 0.5 * x * (1.0 + jax.scipy.special.erf(x / math.sqrt(2.0)))


def reference_forward(expert_features, params):
    x = expert_features.astype(jnp.float32)
    B, L, E, D = x.shape
    adj = jax.nn.sigmoid(params["adjacency_logits"])
    flat = x.reshape(-1, E, D)
    Wn, bn = params["neighbor_w"], params["neighbor_b"]
    Ws, bs = params["self_w"], params["self_b"]
    Wm, bm = params["message_w"], params["message_b"]
    outs = []
    for i in range(E):
        cur = flat[:, i, :]
        msg = jnp.zeros_like(cur)
        for j in range(E):
            if j == i:
                continue
            oth = flat[:, j, :]
            concat = jnp.concatenate([cur, oth], axis=1)
            cw = jax.nn.sigmoid((concat @ Wm.T + bm)[:, 0])
            msg = msg + oth * (adj[i, j] * cw)[:, None]
        outs.append(_ref_gelu(msg @ Wn.T + bn + cur @ Ws.T + bs))
    return jnp.stack(outs, axis=1).reshape(B, L, E, D)


# ----------------------------------------------------------------------------
if __name__ == "__main__":
    # Small shapes consistent with the module: batch=2, seq=8, embed=32, experts=4
    B, L, D, E = 2, 8, 32, 4

    key = jax.random.PRNGKey(0)
    ks = jax.random.split(key, 8)
    params = {
        "neighbor_w": 0.05 * jax.random.normal(ks[0], (D, D), jnp.float32),
        "neighbor_b": 0.05 * jax.random.normal(ks[1], (D,), jnp.float32),
        "self_w": 0.05 * jax.random.normal(ks[2], (D, D), jnp.float32),
        "self_b": 0.05 * jax.random.normal(ks[3], (D,), jnp.float32),
        "message_w": 0.05 * jax.random.normal(ks[4], (1, 2 * D), jnp.float32),
        "message_b": 0.05 * jax.random.normal(ks[5], (1,), jnp.float32),
        "adjacency_logits": jax.random.normal(ks[6], (E, E), jnp.float32),
    }
    expert_features = jax.random.normal(ks[7], (B, L, E, D), jnp.float32)

    ref = jax.block_until_ready(reference_forward(expert_features, params))

    # f32 matmul path (tight tolerance)
    out = jax.block_until_ready(expert_graph_conv(expert_features, params))
    assert out.shape == (B, L, E, D), out.shape
    err = float(np.max(np.abs(np.asarray(out) - np.asarray(ref))))
    assert err < 1e-4, "f32 mismatch: max abs err = %g" % err

    # bf16 operands / bf16 x from HBM (relaxed tolerance, per perf review)
    out_bf16 = jax.block_until_ready(
        expert_graph_conv(expert_features, params, use_bf16=True))
    err_bf = float(np.max(np.abs(np.asarray(out_bf16) - np.asarray(ref))))
    assert err_bf < 2e-2, "bf16 mismatch: max abs err = %g" % err_bf

    print("KERNEL_OK")
</pallas_src>

<mosaic_0001>
module attributes {stable_mosaic.version = 11 : i64} {
  func.func @expert_graph_conv_kernel(%arg0: i32, %arg1: memref<1xf32, #tpu.memory_space<smem>>, %arg2: memref<8x128xf32, #tpu.memory_space<vmem>>, %arg3: memref<128x512xf32, #tpu.memory_space<vmem>>, %arg4: memref<1x512xf32, #tpu.memory_space<vmem>>, %arg5: memref<512x128xf32, #tpu.memory_space<vmem>>, %arg6: memref<128x128xf32, #tpu.memory_space<vmem>>, %arg7: memref<1x128xf32, #tpu.memory_space<vmem>>, %arg8: memref<8x128xf32, #tpu.memory_space<vmem>>) attributes {dimension_semantics = [#tpu.dimension_semantics<parallel>], iteration_bounds = array<i64: 2>, scalar_prefetch = 0 : i64, scratch_operands = 0 : i64, tpu.core_type = #tpu.core_type<tc>, window_params = [{transform_indices = @transform_0, window_bounds = array<i64: 1>}, {transform_indices = @transform_1, window_bounds = array<i64: 8, 128>}, {pipeline_mode = #tpu.pipeline_mode<synchronous>, transform_indices = @transform_2, window_bounds = array<i64: 128, 512>}, {pipeline_mode = #tpu.pipeline_mode<synchronous>, transform_indices = @transform_3, window_bounds = array<i64: 1, 512>}, {pipeline_mode = #tpu.pipeline_mode<synchronous>, transform_indices = @transform_4, window_bounds = array<i64: 512, 128>}, {pipeline_mode = #tpu.pipeline_mode<synchronous>, transform_indices = @transform_5, window_bounds = array<i64: 128, 128>}, {pipeline_mode = #tpu.pipeline_mode<synchronous>, transform_indices = @transform_6, window_bounds = array<i64: 1, 128>}, {transform_indices = @transform_7, window_bounds = array<i64: 8, 128>}]} {
    %c0 = arith.constant 0 : index
    %c0_0 = arith.constant 0 : index
    %0 = vector.load %arg2[%c0, %c0_0] : memref<8x128xf32, #tpu.memory_space<vmem>>, vector<8x128xf32>
    %c0_1 = arith.constant 0 : index
    %1 = memref.load %arg1[%c0_1] : memref<1xf32, #tpu.memory_space<smem>>
    %c0_2 = arith.constant 0 : index
    %c0_3 = arith.constant 0 : index
    %2 = vector.load %arg3[%c0_2, %c0_3] : memref<128x512xf32, #tpu.memory_space<vmem>>, vector<128x512xf32>
    %cst = arith.constant dense<0.000000e+00> : vector<8x512xf32>
    %3 = tpu.matmul %0, %2, %cst {dimension_numbers = #tpu.dot_dimension_numbers<[1], [0], [0], [1], [0, 0, 1, 1], [], []>} : vector<8x128xf32>, vector<128x512xf32>, vector<8x512xf32> -> vector<8x512xf32>
    %4 = vector.broadcast %1 : f32 to vector<8x512xf32>
    %5 = arith.addf %3, %4 : vector<8x512xf32>
    %6 = arith.negf %5 : vector<8x512xf32>
    %7 = math.exp %6 : vector<8x512xf32>
    %cst_4 = arith.constant 1.000000e+00 : f32
    %8 = vector.broadcast %cst_4 : f32 to vector<8x512xf32>
    %9 = arith.addf %8, %7 : vector<8x512xf32>
    %10 = arith.divf %8, %9 : vector<8x512xf32>
    %c0_5 = arith.constant 0 : index
    %c0_6 = arith.constant 0 : index
    %11 = vector.load %arg4[%c0_5, %c0_6] : memref<1x512xf32, #tpu.memory_space<vmem>>, vector<1x512xf32>
    %12 = vector.broadcast %11 : vector<1x512xf32> to vector<8x512xf32>
    %13 = arith.mulf %10, %12 : vector<8x512xf32>
    %14 = tpu.concatenate %0, %0, %0, %0 in 1 : vector<8x128xf32>, vector<8x128xf32>, vector<8x128xf32>, vector<8x128xf32> -> vector<8x512xf32>
    %15 = arith.mulf %13, %14 : vector<8x512xf32>
    %c0_7 = arith.constant 0 : index
    %c0_8 = arith.constant 0 : index
    %16 = vector.load %arg5[%c0_7, %c0_8] : memref<512x128xf32, #tpu.memory_space<vmem>>, vector<512x128xf32>
    %cst_9 = arith.constant dense<0.000000e+00> : vector<8x128xf32>
    %17 = tpu.matmul %15, %16, %cst_9 {dimension_numbers = #tpu.dot_dimension_numbers<[1], [0], [0], [1], [0, 0, 1, 1], [], []>} : vector<8x512xf32>, vector<512x128xf32>, vector<8x128xf32> -> vector<8x128xf32>
    %c0_10 = arith.constant 0 : index
    %c0_11 = arith.constant 0 : index
    %18 = vector.load %arg6[%c0_10, %c0_11] : memref<128x128xf32, #tpu.memory_space<vmem>>, vector<128x128xf32>
    %cst_12 = arith.constant dense<0.000000e+00> : vector<8x128xf32>
    %19 = tpu.matmul %0, %18, %cst_12 {dimension_numbers = #tpu.dot_dimension_numbers<[1], [0], [0], [1], [0, 0, 1, 1], [], []>} : vector<8x128xf32>, vector<128x128xf32>, vector<8x128xf32> -> vector<8x128xf32>
    %20 = arith.addf %17, %19 : vector<8x128xf32>
    %c0_13 = arith.constant 0 : index
    %c0_14 = arith.constant 0 : index
    %21 = vector.load %arg7[%c0_13, %c0_14] : memref<1x128xf32, #tpu.memory_space<vmem>>, vector<1x128xf32>
    %22 = vector.broadcast %21 : vector<1x128xf32> to vector<8x128xf32>
    %23 = arith.addf %20, %22 : vector<8x128xf32>
    %cst_15 = arith.constant 5.000000e-01 : f32
    %24 = vector.broadcast %cst_15 : f32 to vector<8x128xf32>
    %25 = arith.mulf %24, %23 : vector<8x128xf32>
    %cst_16 = arith.constant 0.707106769 : f32
    %26 = vector.broadcast %cst_16 : f32 to vector<8x128xf32>
    %27 = arith.mulf %23, %26 : vector<8x128xf32>
    %cst_17 = arith.constant 0.000000e+00 : f32
    %28 = vector.broadcast %cst_17 : f32 to vector<8x128xf32>
    %29 = arith.cmpf oge, %27, %28 : vector<8x128xf32>
    %cst_18 = arith.constant 1.000000e+00 : f32
    %cst_19 = arith.constant -1.000000e+00 : f32
    %30 = vector.broadcast %cst_18 : f32 to vector<8x128xf32>
    %31 = vector.broadcast %cst_19 : f32 to vector<8x128xf32>
    %32 = arith.select %29, %30, %31 : vector<8x128xi1>, vector<8x128xf32>
    %33 = math.absf %27 : vector<8x128xf32>
    %cst_20 = arith.constant 0.327591091 : f32
    %34 = vector.broadcast %cst_20 : f32 to vector<8x128xf32>
    %35 = arith.mulf %34, %33 : vector<8x128xf32>
    %cst_21 = arith.constant 1.000000e+00 : f32
    %36 = vector.broadcast %cst_21 : f32 to vector<8x128xf32>
    %37 = arith.addf %36, %35 : vector<8x128xf32>
    %cst_22 = arith.constant 1.000000e+00 : f32
    %38 = vector.broadcast %cst_22 : f32 to vector<8x128xf32>
    %39 = arith.divf %38, %37 : vector<8x128xf32>
    %cst_23 = arith.constant 1.06140542 : f32
    %40 = vector.broadcast %cst_23 : f32 to vector<8x128xf32>
    %41 = arith.mulf %40, %39 : vector<8x128xf32>
    %cst_24 = arith.constant -1.45315206 : f32
    %42 = vector.broadcast %cst_24 : f32 to vector<8x128xf32>
    %43 = arith.addf %41, %42 : vector<8x128xf32>
    %44 = arith.mulf %43, %39 : vector<8x128xf32>
    %cst_25 = arith.constant 1.42141378 : f32
    %45 = vector.broadcast %cst_25 : f32 to vector<8x128xf32>
    %46 = arith.addf %44, %45 : vector<8x128xf32>
    %47 = arith.mulf %46, %39 : vector<8x128xf32>
    %cst_26 = arith.constant -0.284496725 : f32
    %48 = vector.broadcast %cst_26 : f32 to vector<8x128xf32>
    %49 = arith.addf %47, %48 : vector<8x128xf32>
    %50 = arith.mulf %49, %39 : vector<8x128xf32>
    %cst_27 = arith.constant 0.254829586 : f32
    %51 = vector.broadcast %cst_27 : f32 to vector<8x128xf32>
    %52 = arith.addf %50, %51 : vector<8x128xf32>
    %53 = arith.mulf %52, %39 : vector<8x128xf32>
    %cst_28 = arith.constant 0.000000e+00 : f32
    %54 = vector.broadcast %cst_28 : f32 to vector<8x128xf32>
    %55 = arith.subf %54, %33 : vector<8x128xf32>
    %56 = arith.mulf %55, %33 : vector<8x128xf32>
    %57 = math.exp %56 : vector<8x128xf32>
    %58 = arith.mulf %53, %57 : vector<8x128xf32>
    %cst_29 = arith.constant 1.000000e+00 : f32
    %59 = vector.broadcast %cst_29 : f32 to vector<8x128xf32>
    %60 = arith.subf %59, %58 : vector<8x128xf32>
    %61 = arith.mulf %32, %60 : vector<8x128xf32>
    %cst_30 = arith.constant 1.000000e+00 : f32
    %62 = vector.broadcast %cst_30 : f32 to vector<8x128xf32>
    %63 = arith.addf %62, %61 : vector<8x128xf32>
    %64 = arith.mulf %25, %63 : vector<8x128xf32>
    %c0_31 = arith.constant 0 : index
    %c0_32 = arith.constant 0 : index
    %65 = vector.load %arg8[%c0_31, %c0_32] : memref<8x128xf32, #tpu.memory_space<vmem>>, vector<8x128xf32>
    tpu.vector_store %arg8[%c0_31, %c0_32], %64 {strides = array<i32>} : memref<8x128xf32, #tpu.memory_space<vmem>>, vector<8x128xf32>,
    return
  }
  func.func @transform_0(%arg0: i32) -> i32 {
    %c0_i32 = arith.constant 0 : i32
    %c0_i32_0 = arith.constant 0 : i32
    return %c0_i32 : i32
  }
  func.func @transform_1(%arg0: i32) -> (i32, i32) {
    %c0_i32 = arith.constant 0 : i32
    %c0_i32_0 = arith.constant 0 : i32
    return %arg0, %c0_i32 : i32, i32
  }
  func.func @transform_2(%arg0: i32) -> (i32, i32) {
    %c0_i32 = arith.constant 0 : i32
    %c0_i32_0 = arith.constant 0 : i32
    %c0_i32_1 = arith.constant 0 : i32
    return %c0_i32, %c0_i32_0 : i32, i32
  }
  func.func @transform_3(%arg0: i32) -> (i32, i32) {
    %c0_i32 = arith.constant 0 : i32
    %c0_i32_0 = arith.constant 0 : i32
    %c0_i32_1 = arith.constant 0 : i32
    return %c0_i32, %c0_i32_0 : i32, i32
  }
  func.func @transform_4(%arg0: i32) -> (i32, i32) {
    %c0_i32 = arith.constant 0 : i32
    %c0_i32_0 = arith.constant 0 : i32
    %c0_i32_1 = arith.constant 0 : i32
    return %c0_i32, %c0_i32_0 : i32, i32
  }
  func.func @transform_5(%arg0: i32) -> (i32, i32) {
    %c0_i32 = arith.constant 0 : i32
    %c0_i32_0 = arith.constant 0 : i32
    %c0_i32_1 = arith.constant 0 : i32
    return %c0_i32, %c0_i32_0 : i32, i32
  }
  func.func @transform_6(%arg0: i32) -> (i32, i32) {
    %c0_i32 = arith.constant 0 : i32
    %c0_i32_0 = arith.constant 0 : i32
    %c0_i32_1 = arith.constant 0 : i32
    return %c0_i32, %c0_i32_0 : i32, i32
  }
  func.func @transform_7(%arg0: i32) -> (i32, i32) {
    %c0_i32 = arith.constant 0 : i32
    %c0_i32_0 = arith.constant 0 : i32
    return %arg0, %c0_i32 : i32, i32
  }
}

</mosaic_0001>

<llo_original>
// kernel: tpu_custom_call.1
$region0: #{tpu_custom_call.1}
  #allocation0 [shape = 'u32[]', space=smem, size = 0x4, offset = 0x4, fixed_abs, tag = 'smem constant byte address 0x4 - core index']
  #allocation1 [shape = 'u32[144,128]{1,0:T(1,128)}', space=vmem, size = 0x12000, scoped, tag = 'internal scratch']
  #allocation2 [shape = 'f32[1]{0:T(128)S(6)}', space=smem, size = 0x200, scoped, tag = 'scoped memory for tpu_custom_call.1']
  %s0 = inlined_call_operand.<no memory space> [shape: f32[1], index: 0, kind: input, shape index: {}]
  %s1 = inlined_call_operand.hbm [shape: f32[16,128], index: 1, kind: input, shape index: {}]
  %s2 = inlined_call_operand.hbm [shape: f32[128,512], index: 2, kind: input, shape index: {}]
  %s3 = inlined_call_operand.vmem [shape: f32[1,512], index: 3, kind: input, shape index: {}]
  %s4 = inlined_call_operand.hbm [shape: f32[512,128], index: 4, kind: input, shape index: {}]
  %s5 = inlined_call_operand.hbm [shape: f32[128,128], index: 5, kind: input, shape index: {}]
  %s6 = inlined_call_operand.vmem [shape: f32[1,128], index: 6, kind: input, shape index: {}]
  %s7 = inlined_call_operand.hbm [shape: f32[16,128], index: 7, kind: output, shape index: {}]
  %s8 = sld [smem:[#allocation0]]
  $region77: #{tpu_custom_call.1} parent=0
    _
  %s10 = ssub.s32 1, %s8
  %s11 = scalar_select 0, %s10, %s8
  %12 = sst [smem:[#allocation2]] %s0
  $region1: #{tpu_custom_call.1} parent=0
    #allocation3 [shape = 'u8[8192]{0}', space=vmem, size = 0x2000, scoped, tag = 'input window, operand 1']
    #allocation4 [shape = 's32[2]{0}', space=sflag, size = 0x8, scoped, tag = 'scoped memory for tpu_custom_call.1']
    #allocation5 [shape = 's32[2]{0}', space=sflag, size = 0x8, scoped, tag = 'scoped memory for tpu_custom_call.1']
    #allocation6 [shape = 'u8[262144]{0}', space=vmem, size = 0x40000, scoped, tag = 'input window, operand 2, single buffered']
    #allocation7 [shape = 's32[1]{0}', space=sflag, size = 0x4, scoped, tag = 'scoped memory for tpu_custom_call.1']
    #allocation8 [shape = 'u8[262144]{0}', space=vmem, size = 0x40000, scoped, tag = 'input window, operand 4, single buffered']
    #allocation9 [shape = 'u8[65536]{0}', space=vmem, size = 0x10000, scoped, tag = 'input window, operand 5, single buffered']
    #allocation10 [shape = 's32[1]{0}', space=sflag, size = 0x4, scoped, tag = 'scoped memory for tpu_custom_call.1']
    #allocation11 [shape = 'u8[8192]{0}', space=vmem, size = 0x2000, scoped, tag = 'output window, operand 0']
    %13 = vsyncpa [#allocation4], 0
    %s14 = scalar_lea.sflag [#allocation4], 1
    %15 = vsyncpa %s14, 0
    %16 = vsyncpa [#allocation7], 0
    %17 = vsyncpa [#allocation10], 0
    %18 = vsyncpa [#allocation5], 0
    %s19 = scalar_lea.sflag [#allocation5], 1
    %20 = vsyncpa %s19, 0
    loop: start=0, step=1, limit=4
    $region2: #{tpu_custom_call.1} parent=1 // loop_pre_header
      _
    $region3: #{tpu_custom_call.1} parent=1 // loop_header
      %s22 = sphi 0, %s26
      %p23 = scmp.ge.s32.totalorder %s22, 4
      %s30 = sphi 0, %s30
      %s32 = sphi 0, %s30
      %s33 = sphi 0, %s32
      %s47 = sphi 0, %s33
      %s53 = sphi 0, %s55
      %s56 = sphi 0, %s53
      %s57 = sphi 0, %s56
      %s73 = sphi 0, %s57
      %s77 = sphi 0, %s77
      %s79 = sphi 0, %s77
      %s80 = sphi 0, %s79
      %s94 = sphi 0, %s80
      %s98 = sphi 0, %s98
      %s100 = sphi 0, %s98
      %s101 = sphi 0, %s100
      %s115 = sphi 0, %s101
      %s119 = sphi 0, %s119
      %s121 = sphi 0, %s119
      %s122 = sphi 0, %s121
      %s136 = sphi 0, %s122
      %s140 = sphi 0, %s140
      %s142 = sphi 0, %s140
      %s143 = sphi 0, %s142
      %s157 = sphi 0, %s143
      %s161 = sphi 0, %s161
      %s163 = sphi 0, %s161
      %s164 = sphi 0, %s163
      %s178 = sphi 0, %s164
      %s184 = sphi 0, %s186
      %s187 = sphi 0, %s184
      %s188 = sphi 0, %s187
      %s204 = sphi 0, %s188
    $region4: #{tpu_custom_call.1} parent=1 // loop_header_branch
      %25 = sbr.rel (%p23) target = $region8
    $region5: #{tpu_custom_call.1} parent=1 // loop_body
      %s27 = ssub.s32 %s22, 1
      %s28 = ssub.s32 %s22, 2
      %s29 = sadd.s32 %s22, 1
      %s31 = sadd.s32 %s30, 1
      %p34 = scmp.eq.s32.totalorder %s22, 1
      %p35 = scmp.ne.s32.totalorder %s30, %s32
      %p36 = scmp.eq.s32.totalorder %s22, 0
      %p37 = por %p35, %p36
      %p38 = scmp.ne.s32.totalorder %s30, %s32
      %p39 = scmp.eq.s32.totalorder %s27, 1
      %p40 = por %p38, %p39
      %p41 = scmp.ne.s32.totalorder %s32, %s33
      %p42 = scmp.eq.s32.totalorder %s27, 0
      %p43 = por %p41, %p42
      %p44 = scmp.ne.s32.totalorder %s32, %s33
      %p45 = scmp.eq.s32.totalorder %s28, 1
      %p46 = por %p44, %p45
      %p48 = scmp.ne.s32.totalorder %s33, %s47
      %p49 = scmp.eq.s32.totalorder %s28, 0
      %p50 = por %p48, %p49
      %s51 = ssub.s32 %s22, %s29
      %p52 = scmp.eq.s32.totalorder %s51, 0
      %s54 = sadd.s32 %s53, 1
      %s55 = scalar_select %p52, %s53, %s54
      %p58 = pneg %p52
      %p59 = scmp.eq.s32.totalorder %s22, 1
      %p60 = por %p58, %p59
      %p61 = scmp.ne.s32.totalorder %s53, %s56
      %p62 = scmp.eq.s32.totalorder %s22, 0
      %p63 = por %p61, %p62
      %p64 = scmp.ne.s32.totalorder %s53, %s56
      %p65 = scmp.eq.s32.totalorder %s27, 1
      %p66 = por %p64, %p65
      %p67 = scmp.ne.s32.totalorder %s56, %s57
      %p68 = scmp.eq.s32.totalorder %s27, 0
      %p69 = por %p67, %p68
      %p70 = scmp.ne.s32.totalorder %s56, %s57
      %p71 = scmp.eq.s32.totalorder %s28, 1
      %p72 = por %p70, %p71
      %p74 = scmp.ne.s32.totalorder %s57, %s73
      %p75 = scmp.eq.s32.totalorder %s28, 0
      %p76 = por %p74, %p75
      %s78 = sadd.s32 %s77, 1
      %p81 = scmp.eq.s32.totalorder %s22, 1
      %p82 = scmp.ne.s32.totalorder %s77, %s79
      %p83 = scmp.eq.s32.totalorder %s22, 0
      %p84 = por %p82, %p83
      %p85 = scmp.ne.s32.totalorder %s77, %s79
      %p86 = scmp.eq.s32.totalorder %s27, 1
      %p87 = por %p85, %p86
      %p88 = scmp.ne.s32.totalorder %s79, %s80
      %p89 = scmp.eq.s32.totalorder %s27, 0
      %p90 = por %p88, %p89
      %p91 = scmp.ne.s32.totalorder %s79, %s80
      %p92 = scmp.eq.s32.totalorder %s28, 1
      %p93 = por %p91, %p92
      %p95 = scmp.ne.s32.totalorder %s80, %s94
      %p96 = scmp.eq.s32.totalorder %s28, 0
      %p97 = por %p95, %p96
      %s99 = sadd.s32 %s98, 1
      %p102 = scmp.eq.s32.totalorder %s22, 1
      %p103 = scmp.ne.s32.totalorder %s98, %s100
      %p104 = scmp.eq.s32.totalorder %s22, 0
      %p105 = por %p103, %p104
      %p106 = scmp.ne.s32.totalorder %s98, %s100
      %p107 = scmp.eq.s32.totalorder %s27, 1
      %p108 = por %p106, %p107
      %p109 = scmp.ne.s32.totalorder %s100, %s101
      %p110 = scmp.eq.s32.totalorder %s27, 0
      %p111 = por %p109, %p110
      %p112 = scmp.ne.s32.totalorder %s100, %s101
      %p113 = scmp.eq.s32.totalorder %s28, 1
      %p114 = por %p112, %p113
      %p116 = scmp.ne.s32.totalorder %s101, %s115
      %p117 = scmp.eq.s32.totalorder %s28, 0
      %p118 = por %p116, %p117
      %s120 = sadd.s32 %s119, 1
      %p123 = scmp.eq.s32.totalorder %s22, 1
      %p124 = scmp.ne.s32.totalorder %s119, %s121
      %p125 = scmp.eq.s32.totalorder %s22, 0
      %p126 = por %p124, %p125
      %p127 = scmp.ne.s32.totalorder %s119, %s121
      %p128 = scmp.eq.s32.totalorder %s27, 1
      %p129 = por %p127, %p128
      %p130 = scmp.ne.s32.totalorder %s121, %s122
      %p131 = scmp.eq.s32.totalorder %s27, 0
      %p132 = por %p130, %p131
      %p133 = scmp.ne.s32.totalorder %s121, %s122
      %p134 = scmp.eq.s32.totalorder %s28, 1
      %p135 = por %p133, %p134
      %p137 = scmp.ne.s32.totalorder %s122, %s136
      %p138 = scmp.eq.s32.totalorder %s28, 0
      %p139 = por %p137, %p138
      %s141 = sadd.s32 %s140, 1
      %p144 = scmp.eq.s32.totalorder %s22, 1
      %p145 = scmp.ne.s32.totalorder %s140, %s142
      %p146 = scmp.eq.s32.totalorder %s22, 0
      %p147 = por %p145, %p146
      %p148 = scmp.ne.s32.totalorder %s140, %s142
      %p149 = scmp.eq.s32.totalorder %s27, 1
      %p150 = por %p148, %p149
      %p151 = scmp.ne.s32.totalorder %s142, %s143
      %p152 = scmp.eq.s32.totalorder %s27, 0
      %p153 = por %p151, %p152
      %p154 = scmp.ne.s32.totalorder %s142, %s143
      %p155 = scmp.eq.s32.totalorder %s28, 1
      %p156 = por %p154, %p155
      %p158 = scmp.ne.s32.totalorder %s143, %s157
      %p159 = scmp.eq.s32.totalorder %s28, 0
      %p160 = por %p158, %p159
      %s162 = sadd.s32 %s161, 1
      %p165 = scmp.eq.s32.totalorder %s22, 1
      %p166 = scmp.ne.s32.totalorder %s161, %s163
      %p167 = scmp.eq.s32.totalorder %s22, 0
      %p168 = por %p166, %p167
      %p169 = scmp.ne.s32.totalorder %s161, %s163
      %p170 = scmp.eq.s32.totalorder %s27, 1
      %p171 = por %p169, %p170
      %p172 = scmp.ne.s32.totalorder %s163, %s164
      %p173 = scmp.eq.s32.totalorder %s27, 0
      %p174 = por %p172, %p173
      %p175 = scmp.ne.s32.totalorder %s163, %s164
      %p176 = scmp.eq.s32.totalorder %s28, 1
      %p177 = por %p175, %p176
      %p179 = scmp.ne.s32.totalorder %s164, %s178
      %p180 = scmp.eq.s32.totalorder %s28, 0
      %p181 = por %p179, %p180
      %s182 = ssub.s32 %s22, %s29
      %p183 = scmp.eq.s32.totalorder %s182, 0
      %s185 = sadd.s32 %s184, 1
      %s186 = scalar_select %p183, %s184, %s185
      %p189 = pneg %p183
      %p190 = scmp.eq.s32.totalorder %s22, 1
      %p191 = por %p189, %p190
      %p192 = scmp.ne.s32.totalorder %s184, %s187
      %p193 = scmp.eq.s32.totalorder %s22, 0
      %p194 = por %p192, %p193
      %p195 = scmp.ne.s32.totalorder %s184, %s187
      %p196 = scmp.eq.s32.totalorder %s27, 1
      %p197 = por %p195, %p196
      %p198 = scmp.ne.s32.totalorder %s187, %s188
      %p199 = scmp.eq.s32.totalorder %s27, 0
      %p200 = por %p198, %p199
      %p201 = scmp.ne.s32.totalorder %s187, %s188
      %p202 = scmp.eq.s32.totalorder %s28, 1
      %p203 = por %p201, %p202
      %p205 = scmp.ne.s32.totalorder %s188, %s204
      %p206 = scmp.eq.s32.totalorder %s28, 0
      %p207 = por %p205, %p206
      %p208 = scmp.le.s32.totalorder 1, %s22
      %p209 = scmp.lt.s32.totalorder %s22, 3
      %p210 = pnand %p208, %p209
      %p211 = pneg %p210
      // Predicated region
      $region9: #{tpu_custom_call.1} parent=5 // pred_check
        _
      $region10: #{tpu_custom_call.1} parent=5 // pred_check_branch
        %213 = sbr.rel (%p210) target = $region12
      $region11: #{tpu_custom_call.1} parent=5 // pred_region
        %s214 = ssub.s32 %s22, 1
        // Predicated region
        $region13: #{tpu_custom_call.1} parent=11 // pred_check
          %p215 = pneg %p43
        $region14: #{tpu_custom_call.1} parent=11 // pred_check_branch
          %217 = sbr.rel (%p215) target = $region16
        $region15: #{tpu_custom_call.1} parent=11 // pred_region
          _
        $region16: #{tpu_custom_call.1} parent=11 // pred_fallthru
          _
        // Predicated region
        $region17: #{tpu_custom_call.1} parent=11 // pred_check
          %p218 = pneg %p90
        $region18: #{tpu_custom_call.1} parent=11 // pred_check_branch
          %220 = sbr.rel (%p218) target = $region20
        $region19: #{tpu_custom_call.1} parent=11 // pred_region
          %s222 = ssub.s32 8192, 8192
          %223 = vsyncadd [#allocation7], %s222
          %s224 = sshll.u32 [#allocation6], 4
          %s225 = int_to_ptr.vmem [resolvable:$true] %s224
          %230 = dma.hbm_to_vmem [thread:$0]  %s2, 8192, %s225, [#allocation7], 512, 512, 32
        $region20: #{tpu_custom_call.1} parent=11 // pred_fallthru
          _
        // Predicated region
        $region21: #{tpu_custom_call.1} parent=11 // pred_check
          %p231 = pneg %p111
        $region22: #{tpu_custom_call.1} parent=11 // pred_check_branch
          %233 = sbr.rel (%p231) target = $region24
        $region23: #{tpu_custom_call.1} parent=11 // pred_region
          _
        $region24: #{tpu_custom_call.1} parent=11 // pred_fallthru
          _
        // Predicated region
        $region25: #{tpu_custom_call.1} parent=11 // pred_check
          %p234 = pneg %p132
        $region26: #{tpu_custom_call.1} parent=11 // pred_check_branch
          %236 = sbr.rel (%p234) target = $region28
        $region27: #{tpu_custom_call.1} parent=11 // pred_region
          %s238 = ssub.s32 8192, 8192
          %239 = vsyncadd [#allocation7], %s238
          %s240 = sshll.u32 [#allocation8], 4
          %s241 = int_to_ptr.vmem [resolvable:$true] %s240
          %246 = dma.hbm_to_vmem [thread:$0]  %s4, 8192, %s241, [#allocation7], 128, 128, 8
        $region28: #{tpu_custom_call.1} parent=11 // pred_fallthru
          _
        // Predicated region
        $region29: #{tpu_custom_call.1} parent=11 // pred_check
          %p247 = pneg %p153
        $region30: #{tpu_custom_call.1} parent=11 // pred_check_branch
          %249 = sbr.rel (%p247) target = $region32
        $region31: #{tpu_custom_call.1} parent=11 // pred_region
          %s251 = ssub.s32 2048, 2048
          %252 = vsyncadd [#allocation10], %s251
          %s253 = sshll.u32 [#allocation9], 4
          %s254 = int_to_ptr.vmem [resolvable:$true] %s253
          %259 = dma.hbm_to_vmem [thread:$0]  %s5, 2048, %s254, [#allocation10], 128, 128, 8
        $region32: #{tpu_custom_call.1} parent=11 // pred_fallthru
          _
        // Predicated region
        $region33: #{tpu_custom_call.1} parent=11 // pred_check
          %p260 = pneg %p174
        $region34: #{tpu_custom_call.1} parent=11 // pred_check_branch
          %262 = sbr.rel (%p260) target = $region36
        $region35: #{tpu_custom_call.1} parent=11 // pred_region
          _
        $region36: #{tpu_custom_call.1} parent=11 // pred_fallthru
          _
      $region12: #{tpu_custom_call.1} parent=5 // pred_fallthru
        _
      %p263 = scmp.lt.s32.totalorder %s22, 2
      // Predicated region
      $region37: #{tpu_custom_call.1} parent=5 // pred_check
        %p264 = pneg %p263
      $region38: #{tpu_custom_call.1} parent=5 // pred_check_branch
        %266 = sbr.rel (%p264) target = $region40
      $region39: #{tpu_custom_call.1} parent=5 // pred_region
        // Predicated region
        $region41: #{tpu_custom_call.1} parent=39 // pred_check
          %p267 = pneg %p63
        $region42: #{tpu_custom_call.1} parent=39 // pred_check_branch
          %269 = sbr.rel (%p267) target = $region44
        $region43: #{tpu_custom_call.1} parent=39 // pred_region
          %s270 = sand.u32 %s53, 1
          %s271 = scalar_lea.sflag [#allocation4], %s270
          %s272 = sand.u32 %s53, 1
          %s273 = smul.addr %s272, 8
          %s274 = scalar_lea.vmem [#allocation3], %s273
          %s276 = ssub.s32 128, 128
          %277 = vsyncadd %s271, %s276
          %s278 = smul.addr %s22, 128
          %s279 = scalar_lea.hbm %s1, %s278
          %s281 = sshll.u32 %s274, 4
          %s282 = int_to_ptr.vmem [resolvable:$true] %s281
          %284 = dma.hbm_to_vmem [thread:$0]  %s279, 128, %s282, %s271
        $region44: #{tpu_custom_call.1} parent=39 // pred_fallthru
          _
      $region40: #{tpu_custom_call.1} parent=5 // pred_fallthru
        _
      %p285 = scmp.le.s32.totalorder 1, %s22
      %p286 = scmp.lt.s32.totalorder %s22, 3
      %p287 = pnand %p285, %p286
      %p288 = pneg %p287
      // Predicated region
      $region45: #{tpu_custom_call.1} parent=5 // pred_check
        _
      $region46: #{tpu_custom_call.1} parent=5 // pred_check_branch
        %290 = sbr.rel (%p287) target = $region48
      $region47: #{tpu_custom_call.1} parent=5 // pred_region
        %s291 = ssub.s32 %s22, 1
        %s292 = sand.u32 %s56, 1
        %s293 = scalar_lea.sflag [#allocation4], %s292
        %s294 = sand.u32 %s56, 1
        %s295 = smul.addr %s294, 8
        %s296 = scalar_lea.vmem [#allocation3], %s295
        // Predicated region
        $region49: #{tpu_custom_call.1} parent=47 // pred_check
          %p297 = pneg %p69
        $region50: #{tpu_custom_call.1} parent=47 // pred_check_branch
          %299 = sbr.rel (%p297) target = $region52
        $region51: #{tpu_custom_call.1} parent=47 // pred_region
          %300 = dma.done %s293, 128
        $region52: #{tpu_custom_call.1} parent=47 // pred_fallthru
          _
        // Predicated region
        $region53: #{tpu_custom_call.1} parent=47 // pred_check
          %p301 = pneg %p90
        $region54: #{tpu_custom_call.1} parent=47 // pred_check_branch
          %303 = sbr.rel (%p301) target = $region56
        $region55: #{tpu_custom_call.1} parent=47 // pred_region
          %304 = dma.done [#allocation7], 8192
        $region56: #{tpu_custom_call.1} parent=47 // pred_fallthru
          _
        // Predicated region
        $region57: #{tpu_custom_call.1} parent=47 // pred_check
          %p305 = pneg %p132
        $region58: #{tpu_custom_call.1} parent=47 // pred_check_branch
          %307 = sbr.rel (%p305) target = $region60
        $region59: #{tpu_custom_call.1} parent=47 // pred_region
          %308 = dma.done [#allocation7], 8192
        $region60: #{tpu_custom_call.1} parent=47 // pred_fallthru
          _
        // Predicated region
        $region61: #{tpu_custom_call.1} parent=47 // pred_check
          %p309 = pneg %p153
        $region62: #{tpu_custom_call.1} parent=47 // pred_check_branch
          %311 = sbr.rel (%p309) target = $region64
        $region63: #{tpu_custom_call.1} parent=47 // pred_region
          %312 = dma.done [#allocation10], 2048
        $region64: #{tpu_custom_call.1} parent=47 // pred_fallthru
          _
        %p313 = pneg %p43
        %p314 = pneg %p40
        %s315 = sand.u32 %s56, 1
        %s316 = scalar_lea.sflag [#allocation4], %s315
        %s317 = sand.u32 %s56, 1
        %s318 = smul.addr %s317, 8
        %s319 = scalar_lea.vmem [#allocation3], %s318
        %p320 = pneg %p69
        %p321 = pneg %p66
        %p322 = pneg %p90
        %p323 = pneg %p87
        %p324 = pneg %p111
        %p325 = pneg %p108
        %p326 = pneg %p132
        %p327 = pneg %p129
        %p328 = pneg %p153
        %p329 = pneg %p150
        %p330 = pneg %p174
        %p331 = pneg %p171
        %p332 = pneg %p200
        %p333 = pneg %p197
        %s334 = sand.u32 %s187, 1
        %s335 = scalar_lea.sflag [#allocation5], %s334
        %s336 = sand.u32 %s187, 1
        %s337 = smul.addr %s336, 8
        %s338 = scalar_lea.vmem [#allocation11], %s337
        %v339 = vld [vmem:[%s296] sm:$0xff]
        %s340 = sld [smem:[#allocation2]]
        %v341 = vld [vmem:[#allocation6] sm:$0xff]
        %v342 = vld [vmem:[#allocation6 + $0x8] sm:$0xff]
        %v343 = vld [vmem:[#allocation6 + $0x10] sm:$0xff]
        %v344 = vld [vmem:[#allocation6 + $0x18] sm:$0xff]
        %v345 = vld [vmem:[#allocation6 + $0x20] sm:$0xff]
        %v346 = vld [vmem:[#allocation6 + $0x28] sm:$0xff]
        %v347 = vld [vmem:[#allocation6 + $0x30] sm:$0xff]
        %v348 = vld [vmem:[#allocation6 + $0x38] sm:$0xff]
        %v349 = vld [vmem:[#allocation6 + $0x40] sm:$0xff]
        %v350 = vld [vmem:[#allocation6 + $0x48] sm:$0xff]
        %v351 = vld [vmem:[#allocation6 + $0x50] sm:$0xff]
        %v352 = vld [vmem:[#allocation6 + $0x58] sm:$0xff]
        %v353 = vld [vmem:[#allocation6 + $0x60] sm:$0xff]
        %v354 = vld [vmem:[#allocation6 + $0x68] sm:$0xff]
        %v355 = vld [vmem:[#allocation6 + $0x70] sm:$0xff]
        %v356 = vld [vmem:[#allocation6 + $0x78] sm:$0xff]
        %v357 = vld [vmem:[#allocation6 + $0x80] sm:$0xff]
        %v358 = vld [vmem:[#allocation6 + $0x88] sm:$0xff]
        %v359 = vld [vmem:[#allocation6 + $0x90] sm:$0xff]
        %v360 = vld [vmem:[#allocation6 + $0x98] sm:$0xff]
        %v361 = vld [vmem:[#allocation6 + $0xa0] sm:$0xff]
        %v362 = vld [vmem:[#allocation6 + $0xa8] sm:$0xff]
        %v363 = vld [vmem:[#allocation6 + $0xb0] sm:$0xff]
        %v364 = vld [vmem:[#allocation6 + $0xb8] sm:$0xff]
        %v365 = vld [vmem:[#allocation6 + $0xc0] sm:$0xff]
        %v366 = vld [vmem:[#allocation6 + $0xc8] sm:$0xff]
        %v367 = vld [vmem:[#allocation6 + $0xd0] sm:$0xff]
        %v368 = vld [vmem:[#allocation6 + $0xd8] sm:$0xff]
        %v369 = vld [vmem:[#allocation6 + $0xe0] sm:$0xff]
        %v370 = vld [vmem:[#allocation6 + $0xe8] sm:$0xff]
        %v371 = vld [vmem:[#allocation6 + $0xf0] sm:$0xff]
        %v372 = vld [vmem:[#allocation6 + $0xf8] sm:$0xff]
        %v373 = vld [vmem:[#allocation6 + $0x100] sm:$0xff]
        %v374 = vld [vmem:[#allocation6 + $0x108] sm:$0xff]
        %v375 = vld [vmem:[#allocation6 + $0x110] sm:$0xff]
        %v376 = vld [vmem:[#allocation6 + $0x118] sm:$0xff]
        %v377 = vld [vmem:[#allocation6 + $0x120] sm:$0xff]
        %v378 = vld [vmem:[#allocation6 + $0x128] sm:$0xff]
        %v379 = vld [vmem:[#allocation6 + $0x130] sm:$0xff]
        %v380 = vld [vmem:[#allocation6 + $0x138] sm:$0xff]
        %v381 = vld [vmem:[#allocation6 + $0x140] sm:$0xff]
        %v382 = vld [vmem:[#allocation6 + $0x148] sm:$0xff]
        %v383 = vld [vmem:[#allocation6 + $0x150] sm:$0xff]
        %v384 = vld [vmem:[#allocation6 + $0x158] sm:$0xff]
        %v385 = vld [vmem:[#allocation6 + $0x160] sm:$0xff]
        %v386 = vld [vmem:[#allocation6 + $0x168] sm:$0xff]
        %v387 = vld [vmem:[#allocation6 + $0x170] sm:$0xff]
        %v388 = vld [vmem:[#allocation6 + $0x178] sm:$0xff]
        %v389 = vld [vmem:[#allocation6 + $0x180] sm:$0xff]
        %v390 = vld [vmem:[#allocation6 + $0x188] sm:$0xff]
        %v391 = vld [vmem:[#allocation6 + $0x190] sm:$0xff]
        %v392 = vld [vmem:[#allocation6 + $0x198] sm:$0xff]
        %v393 = vld [vmem:[#allocation6 + $0x1a0] sm:$0xff]
        %v394 = vld [vmem:[#allocation6 + $0x1a8] sm:$0xff]
        %v395 = vld [vmem:[#allocation6 + $0x1b0] sm:$0xff]
        %v396 = vld [vmem:[#allocation6 + $0x1b8] sm:$0xff]
        %v397 = vld [vmem:[#allocation6 + $0x1c0] sm:$0xff]
        %v398 = vld [vmem:[#allocation6 + $0x1c8] sm:$0xff]
        %v399 = vld [vmem:[#allocation6 + $0x1d0] sm:$0xff]
        %v400 = vld [vmem:[#allocation6 + $0x1d8] sm:$0xff]
        %v401 = vld [vmem:[#allocation6 + $0x1e0] sm:$0xff]
        %v402 = vld [vmem:[#allocation6 + $0x1e8] sm:$0xff]
        %v403 = vld [vmem:[#allocation6 + $0x1f0] sm:$0xff]
        %v404 = vld [vmem:[#allocation6 + $0x1f8] sm:$0xff]
        %v405 = vstv %s340
        %406 = vmatprep.subr.mxu0 %v402
        %407 = vmatpush1.msra.mxu0 %v401
        %408 = vmatprep.subr.mxu0 %v398
        %409 = vmatpush1.msra.mxu0 %v397
        %410 = vmatprep.subr.mxu0 %v394
        %411 = vmatpush1.msra.mxu0 %v393
        %412 = vmatprep.subr.mxu0 %v390
        %413 = vmatpush1.msra.mxu0 %v389
        %414 = vmatprep.subr.mxu0 %v386
        %415 = vmatpush1.msra.mxu0 %v385
        %416 = vmatprep.subr.mxu0 %v382
        %417 = vmatpush1.msra.mxu0 %v381
        %418 = vmatprep.subr.mxu0 %v378
        %419 = vmatpush1.msra.mxu0 %v377
        %420 = vmatprep.subr.mxu0 %v374
        %421 = vmatpush1.msra.mxu0 %v373
        %422 = vmatprep.subr.mxu0 %v370
        %423 = vmatpush1.msra.mxu0 %v369
        %424 = vmatprep.subr.mxu0 %v366
        %425 = vmatpush1.msra.mxu0 %v365
        %426 = vmatprep.subr.mxu0 %v362
        %427 = vmatpush1.msra.mxu0 %v361
        %428 = vmatprep.subr.mxu0 %v358
        %429 = vmatpush1.msra.mxu0 %v357
        %430 = vmatprep.subr.mxu0 %v354
        %431 = vmatpush1.msra.mxu0 %v353
        %432 = vmatprep.subr.mxu0 %v350
        %433 = vmatpush1.msra.mxu0 %v349
        %434 = vmatprep.subr.mxu0 %v346
        %435 = vmatpush1.msra.mxu0 %v345
        %436 = vmatprep.subr.mxu0 %v342
        %437 = vmatpush1.msra.mxu0 %v341
        %438 = vmatprep.subr.mxu0 0.0
        %439 = vmatpush2.msra.mxu0 0.0
        %440 = vmatprep.subr.mxu0 0.0
        %441 = vmatpush2.msra.mxu0 0.0
        %442 = vmatprep.subr.mxu0 0.0
        %443 = vmatpush2.msra.mxu0 0.0
        %444 = vmatprep.subr.mxu0 0.0
        %445 = vmatpush2.msra.mxu0 0.0
        %446 = vmatprep.subr.mxu0 0.0
        %447 = vmatpush2.msra.mxu0 0.0
        %448 = vmatprep.subr.mxu0 0.0
        %449 = vmatpush2.msra.mxu0 0.0
        %450 = vmatprep.subr.mxu0 0.0
        %451 = vmatpush2.msra.mxu0 0.0
        %452 = vmatprep.subr.mxu0 0.0
        %453 = vmatpush2.msra.mxu0 0.0
        %454 = vmatprep.subr.mxu0 0.0
        %455 = vmatpush2.msra.mxu0 0.0
        %456 = vmatprep.subr.mxu0 0.0
        %457 = vmatpush2.msra.mxu0 0.0
        %458 = vmatprep.subr.mxu0 0.0
        %459 = vmatpush2.msra.mxu0 0.0
        %460 = vmatprep.subr.mxu0 0.0
        %461 = vmatpush2.msra.mxu0 0.0
        %462 = vmatprep.subr.mxu0 0.0
        %463 = vmatpush2.msra.mxu0 0.0
        %464 = vmatprep.subr.mxu0 0.0
        %465 = vmatpush2.msra.mxu0 0.0
        %466 = vmatprep.subr.mxu0 0.0
        %467 = vmatpush2.msra.mxu0 0.0
        %468 = vmatprep.subr.mxu0 0.0
        %469 = vmatpush2.msra.mxu0 0.0
        %470 = vmatprep.mubr.f32.mxu0 0.0
        %471 = vmatmul.mubr.f32.gmra.mxu0 %v339
        %v472 = vpop.f32.mrf.mxu0
        %v473 = vadd.f32 %v405, %v472
        %v474 = vpop.f32.mrf.mxu0
        %v475 = vadd.f32 %v405, %v474
        %476 = vdwg.mxu0
        %477 = vmatprep.subr.mxu0 %v404
        %478 = vmatpush1.msra.mxu0 %v403
        %479 = vmatprep.subr.mxu0 %v400
        %480 = vmatpush1.msra.mxu0 %v399
        %481 = vmatprep.subr.mxu0 %v396
        %482 = vmatpush1.msra.mxu0 %v395
        %483 = vmatprep.subr.mxu0 %v392
        %484 = vmatpush1.msra.mxu0 %v391
        %485 = vmatprep.subr.mxu0 %v388
        %486 = vmatpush1.msra.mxu0 %v387
        %487 = vmatprep.subr.mxu0 %v384
        %488 = vmatpush1.msra.mxu0 %v383
        %489 = vmatprep.subr.mxu0 %v380
        %490 = vmatpush1.msra.mxu0 %v379
        %491 = vmatprep.subr.mxu0 %v376
        %492 = vmatpush1.msra.mxu0 %v375
        %493 = vmatprep.subr.mxu0 %v372
        %494 = vmatpush1.msra.mxu0 %v371
        %495 = vmatprep.subr.mxu0 %v368
        %496 = vmatpush1.msra.mxu0 %v367
        %497 = vmatprep.subr.mxu0 %v364
        %498 = vmatpush1.msra.mxu0 %v363
        %499 = vmatprep.subr.mxu0 %v360
        %500 = vmatpush1.msra.mxu0 %v359
        %501 = vmatprep.subr.mxu0 %v356
        %502 = vmatpush1.msra.mxu0 %v355
        %503 = vmatprep.subr.mxu0 %v352
        %504 = vmatpush1.msra.mxu0 %v351
        %505 = vmatprep.subr.mxu0 %v348
        %506 = vmatpush1.msra.mxu0 %v347
        %507 = vmatprep.subr.mxu0 %v344
        %508 = vmatpush1.msra.mxu0 %v343
        %509 = vmatprep.subr.mxu0 0.0
        %510 = vmatpush2.msra.mxu0 0.0
        %511 = vmatprep.subr.mxu0 0.0
        %512 = vmatpush2.msra.mxu0 0.0
        %513 = vmatprep.subr.mxu0 0.0
        %514 = vmatpush2.msra.mxu0 0.0
        %515 = vmatprep.subr.mxu0 0.0
        %516 = vmatpush2.msra.mxu0 0.0
        %517 = vmatprep.subr.mxu0 0.0
        %518 = vmatpush2.msra.mxu0 0.0
        %519 = vmatprep.subr.mxu0 0.0
        %520 = vmatpush2.msra.mxu0 0.0
        %521 = vmatprep.subr.mxu0 0.0
        %522 = vmatpush2.msra.mxu0 0.0
        %523 = vmatprep.subr.mxu0 0.0
        %524 = vmatpush2.msra.mxu0 0.0
        %525 = vmatprep.subr.mxu0 0.0
        %526 = vmatpush2.msra.mxu0 0.0
        %527 = vmatprep.subr.mxu0 0.0
        %528 = vmatpush2.msra.mxu0 0.0
        %529 = vmatprep.subr.mxu0 0.0
        %530 = vmatpush2.msra.mxu0 0.0
        %531 = vmatprep.subr.mxu0 0.0
        %532 = vmatpush2.msra.mxu0 0.0
        %533 = vmatprep.subr.mxu0 0.0
        %534 = vmatpush2.msra.mxu0 0.0
        %535 = vmatprep.subr.mxu0 0.0
        %536 = vmatpush2.msra.mxu0 0.0
        %537 = vmatprep.subr.mxu0 0.0
        %538 = vmatpush2.msra.mxu0 0.0
        %539 = vmatprep.subr.mxu0 0.0
        %540 = vmatpush2.msra.mxu0 0.0
        %541 = vmatprep.mubr.f32.mxu0 0.0
        %542 = vmatmul.mubr.f32.gmra.mxu0 %v339
        %v543 = vpop.f32.mrf.mxu0
        %v544 = vadd.f32 %v405, %v543
        %v545 = vpop.f32.mrf.mxu0
        %v546 = vadd.f32 %v405, %v545
        %547 = vdwg.mxu0
        %v548 = vxor.u32 %v473, 2147483648
        %v549 = vxor.u32 %v475, 2147483648
        %v550 = vxor.u32 %v544, 2147483648
        %v551 = vxor.u32 %v546, 2147483648
        %v552 = vmul.f32 %v548, 1.442695
        %v553 = vpow.pop %v552
        %v554 = vmul.f32 %v549, 1.442695
        %v555 = vpow.pop %v554
        %v556 = vmul.f32 %v550, 1.442695
        %v557 = vpow.pop %v556
        %v558 = vmul.f32 %v551, 1.442695
        %v559 = vpow.pop %v558
        %v560 = vadd.f32 %v553, 1.0
        %v561 = vadd.f32 %v555, 1.0
        %v562 = vadd.f32 %v557, 1.0
        %v563 = vadd.f32 %v559, 1.0
        %v564 = vrcp.pop %v560
        %v565 = vmul.f32 1.0, %v564
        %v566 = vrcp.pop %v561
        %v567 = vmul.f32 1.0, %v566
        %v568 = vrcp.pop %v562
        %v569 = vmul.f32 1.0, %v568
        %v570 = vrcp.pop %v563
        %v571 = vmul.f32 1.0, %v570
        %v572 = vld [vmem:[%s3] sm:$0xf]
        %v574 = vlaneseq
        %v575 = vshrl.u32 %v574, 7
        %v576 = vsub.s32 0, %v575
        %v577 = vrot.slane %v572, %v576
        %v578 = vlaneseq
        %v579 = vshrl.u32 %v578, 7
        %v580 = vsub.s32 1, %v579
        %v581 = vrot.slane %v572, %v580
        %v582 = vlaneseq
        %v583 = vshrl.u32 %v582, 7
        %v584 = vsub.s32 2, %v583
        %v585 = vrot.slane %v572, %v584
        %v586 = vlaneseq
        %v587 = vshrl.u32 %v586, 7
        %v588 = vsub.s32 3, %v587
        %v589 = vrot.slane %v572, %v588
        %v594 = vmul.f32 %v565, %v577
        %v595 = vmul.f32 %v567, %v581
        %v596 = vmul.f32 %v569, %v585
        %v597 = vmul.f32 %v571, %v589
        %v598 = vmul.f32 %v594, %v339
        %v599 = vmul.f32 %v595, %v339
        %v600 = vmul.f32 %v596, %v339
        %v601 = vmul.f32 %v597, %v339
        %v602 = vld [vmem:[#allocation8] sm:$0xff]
        %v603 = vld [vmem:[#allocation8 + $0x8] sm:$0xff]
        %v604 = vld [vmem:[#allocation8 + $0x10] sm:$0xff]
        %v605 = vld [vmem:[#allocation8 + $0x18] sm:$0xff]
        %v606 = vld [vmem:[#allocation8 + $0x20] sm:$0xff]
        %v607 = vld [vmem:[#allocation8 + $0x28] sm:$0xff]
        %v608 = vld [vmem:[#allocation8 + $0x30] sm:$0xff]
        %v609 = vld [vmem:[#allocation8 + $0x38] sm:$0xff]
        %v610 = vld [vmem:[#allocation8 + $0x40] sm:$0xff]
        %v611 = vld [vmem:[#allocation8 + $0x48] sm:$0xff]
        %v612 = vld [vmem:[#allocation8 + $0x50] sm:$0xff]
        %v613 = vld [vmem:[#allocation8 + $0x58] sm:$0xff]
        %v614 = vld [vmem:[#allocation8 + $0x60] sm:$0xff]
        %v615 = vld [vmem:[#allocation8 + $0x68] sm:$0xff]
        %v616 = vld [vmem:[#allocation8 + $0x70] sm:$0xff]
        %v617 = vld [vmem:[#allocation8 + $0x78] sm:$0xff]
        %v618 = vld [vmem:[#allocation8 + $0x80] sm:$0xff]
        %v619 = vld [vmem:[#allocation8 + $0x88] sm:$0xff]
        %v620 = vld [vmem:[#allocation8 + $0x90] sm:$0xff]
        %v621 = vld [vmem:[#allocation8 + $0x98] sm:$0xff]
        %v622 = vld [vmem:[#allocation8 + $0xa0] sm:$0xff]
        %v623 = vld [vmem:[#allocation8 + $0xa8] sm:$0xff]
        %v624 = vld [vmem:[#allocation8 + $0xb0] sm:$0xff]
        %v625 = vld [vmem:[#allocation8 + $0xb8] sm:$0xff]
        %v626 = vld [vmem:[#allocation8 + $0xc0] sm:$0xff]
        %v627 = vld [vmem:[#allocation8 + $0xc8] sm:$0xff]
        %v628 = vld [vmem:[#allocation8 + $0xd0] sm:$0xff]
        %v629 = vld [vmem:[#allocation8 + $0xd8] sm:$0xff]
        %v630 = vld [vmem:[#allocation8 + $0xe0] sm:$0xff]
        %v631 = vld [vmem:[#allocation8 + $0xe8] sm:$0xff]
        %v632 = vld [vmem:[#allocation8 + $0xf0] sm:$0xff]
        %v633 = vld [vmem:[#allocation8 + $0xf8] sm:$0xff]
        %v634 = vld [vmem:[#allocation8 + $0x100] sm:$0xff]
        %v635 = vld [vmem:[#allocation8 + $0x108] sm:$0xff]
        %v636 = vld [vmem:[#allocation8 + $0x110] sm:$0xff]
        %v637 = vld [vmem:[#allocation8 + $0x118] sm:$0xff]
        %v638 = vld [vmem:[#allocation8 + $0x120] sm:$0xff]
        %v639 = vld [vmem:[#allocation8 + $0x128] sm:$0xff]
        %v640 = vld [vmem:[#allocation8 + $0x130] sm:$0xff]
        %v641 = vld [vmem:[#allocation8 + $0x138] sm:$0xff]
        %v642 = vld [vmem:[#allocation8 + $0x140] sm:$0xff]
        %v643 = vld [vmem:[#allocation8 + $0x148] sm:$0xff]
        %v644 = vld [vmem:[#allocation8 + $0x150] sm:$0xff]
        %v645 = vld [vmem:[#allocation8 + $0x158] sm:$0xff]
        %v646 = vld [vmem:[#allocation8 + $0x160] sm:$0xff]
        %v647 = vld [vmem:[#allocation8 + $0x168] sm:$0xff]
        %v648 = vld [vmem:[#allocation8 + $0x170] sm:$0xff]
        %v649 = vld [vmem:[#allocation8 + $0x178] sm:$0xff]
        %v650 = vld [vmem:[#allocation8 + $0x180] sm:$0xff]
        %v651 = vld [vmem:[#allocation8 + $0x188] sm:$0xff]
        %v652 = vld [vmem:[#allocation8 + $0x190] sm:$0xff]
        %v653 = vld [vmem:[#allocation8 + $0x198] sm:$0xff]
        %v654 = vld [vmem:[#allocation8 + $0x1a0] sm:$0xff]
        %v655 = vld [vmem:[#allocation8 + $0x1a8] sm:$0xff]
        %v656 = vld [vmem:[#allocation8 + $0x1b0] sm:$0xff]
        %v657 = vld [vmem:[#allocation8 + $0x1b8] sm:$0xff]
        %v658 = vld [vmem:[#allocation8 + $0x1c0] sm:$0xff]
        %v659 = vld [vmem:[#allocation8 + $0x1c8] sm:$0xff]
        %v660 = vld [vmem:[#allocation8 + $0x1d0] sm:$0xff]
        %v661 = vld [vmem:[#allocation8 + $0x1d8] sm:$0xff]
        %v662 = vld [vmem:[#allocation8 + $0x1e0] sm:$0xff]
        %v663 = vld [vmem:[#allocation8 + $0x1e8] sm:$0xff]
        %v664 = vld [vmem:[#allocation8 + $0x1f0] sm:$0xff]
        %v665 = vld [vmem:[#allocation8 + $0x1f8] sm:$0xff]
        %v666 = vld [vmem:[#allocation9] sm:$0xff]
        %v667 = vld [vmem:[#allocation9 + $0x8] sm:$0xff]
        %v668 = vld [vmem:[#allocation9 + $0x10] sm:$0xff]
        %v669 = vld [vmem:[#allocation9 + $0x18] sm:$0xff]
        %v670 = vld [vmem:[#allocation9 + $0x20] sm:$0xff]
        %v671 = vld [vmem:[#allocation9 + $0x28] sm:$0xff]
        %v672 = vld [vmem:[#allocation9 + $0x30] sm:$0xff]
        %v673 = vld [vmem:[#allocation9 + $0x38] sm:$0xff]
        %v674 = vld [vmem:[#allocation9 + $0x40] sm:$0xff]
        %v675 = vld [vmem:[#allocation9 + $0x48] sm:$0xff]
        %v676 = vld [vmem:[#allocation9 + $0x50] sm:$0xff]
        %v677 = vld [vmem:[#allocation9 + $0x58] sm:$0xff]
        %v678 = vld [vmem:[#allocation9 + $0x60] sm:$0xff]
        %v679 = vld [vmem:[#allocation9 + $0x68] sm:$0xff]
        %v680 = vld [vmem:[#allocation9 + $0x70] sm:$0xff]
        %v681 = vld [vmem:[#allocation9 + $0x78] sm:$0xff]
        %682 = vmatprep.subr.mxu0 0.0
        %683 = vmatpush1.msra.mxu0 %v681
        %684 = vmatprep.subr.mxu0 0.0
        %685 = vmatpush1.msra.mxu0 %v680
        %686 = vmatprep.subr.mxu0 0.0
        %687 = vmatpush1.msra.mxu0 %v679
        %688 = vmatprep.subr.mxu0 0.0
        %689 = vmatpush1.msra.mxu0 %v678
        %690 = vmatprep.subr.mxu0 0.0
        %691 = vmatpush1.msra.mxu0 %v677
        %692 = vmatprep.subr.mxu0 0.0
        %693 = vmatpush1.msra.mxu0 %v676
        %694 = vmatprep.subr.mxu0 0.0
        %695 = vmatpush1.msra.mxu0 %v675
        %696 = vmatprep.subr.mxu0 0.0
        %697 = vmatpush1.msra.mxu0 %v674
        %698 = vmatprep.subr.mxu0 0.0
        %699 = vmatpush1.msra.mxu0 %v673
        %700 = vmatprep.subr.mxu0 0.0
        %701 = vmatpush1.msra.mxu0 %v672
        %702 = vmatprep.subr.mxu0 0.0
        %703 = vmatpush1.msra.mxu0 %v671
        %704 = vmatprep.subr.mxu0 0.0
        %705 = vmatpush1.msra.mxu0 %v670
        %706 = vmatprep.subr.mxu0 0.0
        %707 = vmatpush1.msra.mxu0 %v669
        %708 = vmatprep.subr.mxu0 0.0
        %709 = vmatpush1.msra.mxu0 %v668
        %710 = vmatprep.subr.mxu0 0.0
        %711 = vmatpush1.msra.mxu0 %v667
        %712 = vmatprep.subr.mxu0 0.0
        %713 = vmatpush1.msra.mxu0 %v666
        %714 = vmatprep.subr.mxu0 0.0
        %715 = vmatpush2.msra.mxu0 0.0
        %716 = vmatprep.subr.mxu0 0.0
        %717 = vmatpush2.msra.mxu0 0.0
        %718 = vmatprep.subr.mxu0 0.0
        %719 = vmatpush2.msra.mxu0 0.0
        %720 = vmatprep.subr.mxu0 0.0
        %721 = vmatpush2.msra.mxu0 0.0
        %722 = vmatprep.subr.mxu0 0.0
        %723 = vmatpush2.msra.mxu0 0.0
        %724 = vmatprep.subr.mxu0 0.0
        %725 = vmatpush2.msra.mxu0 0.0
        %726 = vmatprep.subr.mxu0 0.0
        %727 = vmatpush2.msra.mxu0 0.0
        %728 = vmatprep.subr.mxu0 0.0
        %729 = vmatpush2.msra.mxu0 0.0
        %730 = vmatprep.subr.mxu0 0.0
        %731 = vmatpush2.msra.mxu0 0.0
        %732 = vmatprep.subr.mxu0 0.0
        %733 = vmatpush2.msra.mxu0 0.0
        %734 = vmatprep.subr.mxu0 0.0
        %735 = vmatpush2.msra.mxu0 0.0
        %736 = vmatprep.subr.mxu0 0.0
        %737 = vmatpush2.msra.mxu0 0.0
        %738 = vmatprep.subr.mxu0 0.0
        %739 = vmatpush2.msra.mxu0 0.0
        %740 = vmatprep.subr.mxu0 0.0
        %741 = vmatpush2.msra.mxu0 0.0
        %742 = vmatprep.subr.mxu0 0.0
        %743 = vmatpush2.msra.mxu0 0.0
        %744 = vmatprep.subr.mxu0 0.0
        %745 = vmatpush2.msra.mxu0 0.0
        %746 = vmatprep.mubr.f32.mxu0 0.0
        %747 = vmatmul.mubr.f32.gmra.mxu0 %v339
        %v748 = vpop.f32.mrf.mxu0
        %v749 = vadd.f32 0.0, %v748
        %v750 = vpop.f32.mrf.mxu0
        %751 = vdwg.mxu0
        %752 = vmatprep.subr.mxu0 0.0
        %753 = vmatpush1.msra.mxu0 %v617
        %754 = vmatprep.subr.mxu0 0.0
        %755 = vmatpush1.msra.mxu0 %v616
        %756 = vmatprep.subr.mxu0 0.0
        %757 = vmatpush1.msra.mxu0 %v615
        %758 = vmatprep.subr.mxu0 0.0
        %759 = vmatpush1.msra.mxu0 %v614
        %760 = vmatprep.subr.mxu0 0.0
        %761 = vmatpush1.msra.mxu0 %v613
        %762 = vmatprep.subr.mxu0 0.0
        %763 = vmatpush1.msra.mxu0 %v612
        %764 = vmatprep.subr.mxu0 0.0
        %765 = vmatpush1.msra.mxu0 %v611
        %766 = vmatprep.subr.mxu0 0.0
        %767 = vmatpush1.msra.mxu0 %v610
        %768 = vmatprep.subr.mxu0 0.0
        %769 = vmatpush1.msra.mxu0 %v609
        %770 = vmatprep.subr.mxu0 0.0
        %771 = vmatpush1.msra.mxu0 %v608
        %772 = vmatprep.subr.mxu0 0.0
        %773 = vmatpush1.msra.mxu0 %v607
        %774 = vmatprep.subr.mxu0 0.0
        %775 = vmatpush1.msra.mxu0 %v606
        %776 = vmatprep.subr.mxu0 0.0
        %777 = vmatpush1.msra.mxu0 %v605
        %778 = vmatprep.subr.mxu0 0.0
        %779 = vmatpush1.msra.mxu0 %v604
        %780 = vmatprep.subr.mxu0 0.0
        %781 = vmatpush1.msra.mxu0 %v603
        %782 = vmatprep.subr.mxu0 0.0
        %783 = vmatpush1.msra.mxu0 %v602
        %784 = vmatprep.subr.mxu0 0.0
        %785 = vmatpush2.msra.mxu0 %v633
        %786 = vmatprep.subr.mxu0 0.0
        %787 = vmatpush2.msra.mxu0 %v632
        %788 = vmatprep.subr.mxu0 0.0
        %789 = vmatpush2.msra.mxu0 %v631
        %790 = vmatprep.subr.mxu0 0.0
        %791 = vmatpush2.msra.mxu0 %v630
        %792 = vmatprep.subr.mxu0 0.0
        %793 = vmatpush2.msra.mxu0 %v629
        %794 = vmatprep.subr.mxu0 0.0
        %795 = vmatpush2.msra.mxu0 %v628
        %796 = vmatprep.subr.mxu0 0.0
        %797 = vmatpush2.msra.mxu0 %v627
        %798 = vmatprep.subr.mxu0 0.0
        %799 = vmatpush2.msra.mxu0 %v626
        %800 = vmatprep.subr.mxu0 0.0
        %801 = vmatpush2.msra.mxu0 %v625
        %802 = vmatprep.subr.mxu0 0.0
        %803 = vmatpush2.msra.mxu0 %v624
        %804 = vmatprep.subr.mxu0 0.0
        %805 = vmatpush2.msra.mxu0 %v623
        %806 = vmatprep.subr.mxu0 0.0
        %807 = vmatpush2.msra.mxu0 %v622
        %808 = vmatprep.subr.mxu0 0.0
        %809 = vmatpush2.msra.mxu0 %v621
        %810 = vmatprep.subr.mxu0 0.0
        %811 = vmatpush2.msra.mxu0 %v620
        %812 = vmatprep.subr.mxu0 0.0
        %813 = vmatpush2.msra.mxu0 %v619
        %814 = vmatprep.subr.mxu0 0.0
        %815 = vmatpush2.msra.mxu0 %v618
        %816 = vmatprep.mubr.f32.mxu0 %v599
        %817 = vmatmul.mubr.f32.gmra.mxu0 %v598
        %v818 = vpop.f32.mrf.mxu0
        %v819 = vadd.f32 %v749, %v818
        %v820 = vpop.f32.mrf.mxu0
        %821 = vdwg.mxu0
        %822 = vmatprep.subr.mxu0 0.0
        %823 = vmatpush1.msra.mxu0 %v649
        %824 = vmatprep.subr.mxu0 0.0
        %825 = vmatpush1.msra.mxu0 %v648
        %826 = vmatprep.subr.mxu0 0.0
        %827 = vmatpush1.msra.mxu0 %v647
        %828 = vmatprep.subr.mxu0 0.0
        %829 = vmatpush1.msra.mxu0 %v646
        %830 = vmatprep.subr.mxu0 0.0
        %831 = vmatpush1.msra.mxu0 %v645
        %832 = vmatprep.subr.mxu0 0.0
        %833 = vmatpush1.msra.mxu0 %v644
        %834 = vmatprep.subr.mxu0 0.0
        %835 = vmatpush1.msra.mxu0 %v643
        %836 = vmatprep.subr.mxu0 0.0
        %837 = vmatpush1.msra.mxu0 %v642
        %838 = vmatprep.subr.mxu0 0.0
        %839 = vmatpush1.msra.mxu0 %v641
        %840 = vmatprep.subr.mxu0 0.0
        %841 = vmatpush1.msra.mxu0 %v640
        %842 = vmatprep.subr.mxu0 0.0
        %843 = vmatpush1.msra.mxu0 %v639
        %844 = vmatprep.subr.mxu0 0.0
        %845 = vmatpush1.msra.mxu0 %v638
        %846 = vmatprep.subr.mxu0 0.0
        %847 = vmatpush1.msra.mxu0 %v637
        %848 = vmatprep.subr.mxu0 0.0
        %849 = vmatpush1.msra.mxu0 %v636
        %850 = vmatprep.subr.mxu0 0.0
        %851 = vmatpush1.msra.mxu0 %v635
        %852 = vmatprep.subr.mxu0 0.0
        %853 = vmatpush1.msra.mxu0 %v634
        %854 = vmatprep.subr.mxu0 0.0
        %855 = vmatpush2.msra.mxu0 %v665
        %856 = vmatprep.subr.mxu0 0.0
        %857 = vmatpush2.msra.mxu0 %v664
        %858 = vmatprep.subr.mxu0 0.0
        %859 = vmatpush2.msra.mxu0 %v663
        %860 = vmatprep.subr.mxu0 0.0
        %861 = vmatpush2.msra.mxu0 %v662
        %862 = vmatprep.subr.mxu0 0.0
        %863 = vmatpush2.msra.mxu0 %v661
        %864 = vmatprep.subr.mxu0 0.0
        %865 = vmatpush2.msra.mxu0 %v660
        %866 = vmatprep.subr.mxu0 0.0
        %867 = vmatpush2.msra.mxu0 %v659
        %868 = vmatprep.subr.mxu0 0.0
        %869 = vmatpush2.msra.mxu0 %v658
        %870 = vmatprep.subr.mxu0 0.0
        %871 = vmatpush2.msra.mxu0 %v657
        %872 = vmatprep.subr.mxu0 0.0
        %873 = vmatpush2.msra.mxu0 %v656
        %874 = vmatprep.subr.mxu0 0.0
        %875 = vmatpush2.msra.mxu0 %v655
        %876 = vmatprep.subr.mxu0 0.0
        %877 = vmatpush2.msra.mxu0 %v654
        %878 = vmatprep.subr.mxu0 0.0
        %879 = vmatpush2.msra.mxu0 %v653
        %880 = vmatprep.subr.mxu0 0.0
        %881 = vmatpush2.msra.mxu0 %v652
        %882 = vmatprep.subr.mxu0 0.0
        %883 = vmatpush2.msra.mxu0 %v651
        %884 = vmatprep.subr.mxu0 0.0
        %885 = vmatpush2.msra.mxu0 %v650
        %886 = vmatprep.mubr.f32.mxu0 %v601
        %887 = vmatmul.mubr.f32.gmra.mxu0 %v600
        %v888 = vpop.f32.mrf.mxu0
        %v889 = vadd.f32 %v819, %v888
        %v890 = vpop.f32.mrf.mxu0
        %891 = vdwg.mxu0
        %v892 = vld [vmem:[%s6] sm:$0x1]
        %v894 = vlaneseq
        %v895 = vshrl.u32 %v894, 7
        %v896 = vsub.s32 0, %v895
        %v897 = vrot.slane %v892, %v896
        %v899 = vadd.f32 %v889, %v897
        %v900 = vmul.f32 %v899, 0.5
        %v901 = vmul.f32 %v899, 0.70710677
        %vm902 = vcmp.ge.f32.partialorder %v901, 0.0
        %v903 = vsel %vm902, 1.0, -1.0
        %v904 = vand.u32 2147483647, %v901
        %v905 = vmul.f32 %v904, 0.3275911
        %v906 = vadd.f32 %v905, 1.0
        %v907 = vrcp.pop %v906
        %v908 = vmul.f32 1.0, %v907
        %v909 = vmul.f32 %v908, 1.0614054
        %v910 = vadd.f32 %v909, -1.4531521
        %v911 = vmul.f32 %v910, %v908
        %v912 = vadd.f32 %v911, 1.4214138
        %v913 = vmul.f32 %v912, %v908
        %v914 = vadd.f32 %v913, -0.28449672
        %v915 = vmul.f32 %v914, %v908
        %v916 = vadd.f32 %v915, 0.2548296
        %v917 = vmul.f32 %v916, %v908
        %v918 = vsub.f32 0.0, %v904
        %v919 = vmul.f32 %v918, %v904
        %v920 = vmul.f32 %v919, 1.442695
        %v921 = vpow.pop %v920
        %v922 = vmul.f32 %v917, %v921
        %v923 = vsub.f32 1.0, %v922
        %v924 = vmul.f32 %v903, %v923
        %v925 = vadd.f32 %v924, 1.0
        %v926 = vmul.f32 %v900, %v925
        %927 = vst [vmem:[%s338] sm:$0xff] %v926
        %s928 = sand.u32 %s187, 1
        %s929 = scalar_lea.sflag [#allocation5], %s928
        %s930 = sand.u32 %s187, 1
        %s931 = smul.addr %s930, 8
        %s932 = scalar_lea.vmem [#allocation11], %s931
        // Predicated region
        $region65: #{tpu_custom_call.1} parent=47 // pred_check
          %p933 = pneg %p197
        $region66: #{tpu_custom_call.1} parent=47 // pred_check_branch
          %935 = sbr.rel (%p933) target = $region68
        $region67: #{tpu_custom_call.1} parent=47 // pred_region
          %s937 = ssub.s32 128, 128
          %938 = vsyncadd %s929, %s937
          %s939 = smul.addr %s27, 128
          %s940 = scalar_lea.hbm %s7, %s939
          %s942 = sshll.u32 %s932, 4
          %s943 = int_to_ptr.vmem [resolvable:$true] %s942
          %945 = dma.vmem_to_hbm [thread:$0]  %s943, 128, %s940, %s929
        $region68: #{tpu_custom_call.1} parent=47 // pred_fallthru
          _
      $region48: #{tpu_custom_call.1} parent=5 // pred_fallthru
        _
      %p946 = scmp.le.s32.totalorder 2, %s22
      // Predicated region
      $region69: #{tpu_custom_call.1} parent=5 // pred_check
        %p947 = pneg %p946
      $region70: #{tpu_custom_call.1} parent=5 // pred_check_branch
        %949 = sbr.rel (%p947) target = $region72
      $region71: #{tpu_custom_call.1} parent=5 // pred_region
        %s950 = ssub.s32 %s22, 2
        // Predicated region
        $region73: #{tpu_custom_call.1} parent=71 // pred_check
          %p951 = pneg %p203
        $region74: #{tpu_custom_call.1} parent=71 // pred_check_branch
          %953 = sbr.rel (%p951) target = $region76
        $region75: #{tpu_custom_call.1} parent=71 // pred_region
          %s954 = sand.u32 %s188, 1
          %s955 = scalar_lea.sflag [#allocation5], %s954
          %s956 = sand.u32 %s188, 1
          %s957 = smul.addr %s956, 8
          %s958 = scalar_lea.vmem [#allocation11], %s957
          %959 = dma.done %s955, 128
        $region76: #{tpu_custom_call.1} parent=71 // pred_fallthru
          _
      $region72: #{tpu_custom_call.1} parent=5 // pred_fallthru
        _
    $region6: #{tpu_custom_call.1} parent=1 // loop_footer
      %s26 = sadd.s32 1, %s22
    $region7: #{tpu_custom_call.1} parent=1 // loop_footer_branch
      %21 = sbr.rel target = $region3
    $region8: #{tpu_custom_call.1} parent=1 // loop_exit
      _
    %960 = vsyncpa [#allocation4], 1
    %s961 = scalar_lea.sflag [#allocation4], 1
    %962 = vsyncpa %s961, 1
    %963 = vsyncpa [#allocation7], 1
    %964 = vsyncpa [#allocation10], 1
    %965 = vsyncpa [#allocation5], 1
    %s966 = scalar_lea.sflag [#allocation5], 1
    %967 = vsyncpa %s966, 1

</llo_original>
